<compile_context>
chip_gen: v6e
topology: v6e:2x2x1
jax: 0.10.0
libtpu: 0.0.40
codegen_flags: <defaults>
</compile_context>

<pallas_src>
import functools

import jax
import jax.numpy as jnp
from jax.experimental import pallas as pl
from jax.experimental.pallas import tpu as pltpu

LANE = 128  # TPU lane width; hidden/output feature dims padded to this.


def _round_up(n, m):
    return ((n + m - 1) // m) * m


# ----------------------------------------------------------------------------
# Kernel
# ----------------------------------------------------------------------------
def _mlp_kernel(*refs, n_layers, slope):
    """refs = (x_ref, w0_ref, ..., w{n-1}_ref, o_ref).  All tiles in VMEM.

    x_ref:  (tile_b, in_dim)        f32   (cast to bf16 in-kernel)
    w_ref:  (k_i, out_pad_i)        bf16  (pre-transposed; k_0 = in_dim,
                                           later k_i padded to 128)
    o_ref:  (tile_b, out_pad_last)  bf16
    """
    x_ref = refs[0]
    w_refs = refs[1:1 + n_layers]
    o_ref = refs[1 + n_layers]

    # Single f32 HBM read of the activations; bf16 only as the MXU operand.
    h = x_ref[...].astype(jnp.bfloat16)
    for i, w_ref in enumerate(w_refs):
        # Linear (bias=False): bf16 x bf16 -> f32 accumulate on the MXU.
        acc = jnp.dot(h, w_ref[...], preferred_element_type=jnp.float32)
        if i != n_layers - 1:
            # LeakyReLU(negative_slope=slope); exact for 0 < slope < 1.
            # Kept on the f32 accumulator (v5e VPU has no bf16 path).
            acc = jnp.maximum(acc, slope * acc)
            h = acc.astype(jnp.bfloat16)          # bf16 operand for next layer
        else:
            o_ref[...] = acc.astype(o_ref.dtype)  # bf16, lane-dense store


# ----------------------------------------------------------------------------
# One-time weight preparation (hoisted out of the forward hot path)
# ----------------------------------------------------------------------------
def prepare_weights(weights):
    """PyTorch-layout (out, in) f32 weights -> list of bf16 (K, out_pad)
    lane-dense weights (transposed once, zero-padded).

    Layer 0 keeps K = in_dim exactly (so the raw, unpadded input can be fed
    straight into the first matmul); later layers pad K to 128 to match the
    128-padded activation width of the previous layer.  Zero padding is inert
    for bias-free Linear + LeakyReLU (f(0) = 0)."""
    prepped = []
    for i, w in enumerate(weights):
        out_f, in_f = w.shape
        k = in_f if i == 0 else _round_up(in_f, LANE)
        n = _round_up(out_f, LANE)
        wt = jnp.zeros((k, n), jnp.bfloat16)
        wt = wt.at[:in_f, :out_f].set(w.T.astype(jnp.bfloat16))
        prepped.append(wt)
    return prepped


def _choose_tile_b(B, tile_b):
    """Batch tiling: one full-array block for small/medium batches; for large
    batches >=2 blocks (v7x has 2 TensorCores), each >=256 rows (long-M MXU
    streaming on v6e/v7x) and a multiple of 16 (packed bf16 sublanes)."""
    MIN_SPLIT_ROWS = 256
    if B < 2 * MIN_SPLIT_ROWS:
        return B
    tb = min(tile_b, _round_up(-(-B // 2), 16))   # at least 2 grid steps
    tb = max(MIN_SPLIT_ROWS, (tb // 16) * 16)
    return tb


# ----------------------------------------------------------------------------
# Forward wrapper
# ----------------------------------------------------------------------------
@functools.partial(jax.jit, static_argnames=("out_dim", "slope", "tile_b"))
def mlp_forward(x, w_pad, *, out_dim, slope=0.1, tile_b=512):
    """x: (B, *spatial) f32.  w_pad: output of prepare_weights().
    Returns (B, out_dim) in x.dtype."""
    B = x.shape[0]
    x2d = x.reshape(B, -1)                        # x.view(x.size(0), -1)
    in_dim = x2d.shape[1]
    n_layers = len(w_pad)
    out_pad = w_pad[-1].shape[1]
    assert in_dim == w_pad[0].shape[0], "flattened input must match input_size"

    tb = _choose_tile_b(B, tile_b)
    grid = (pl.cdiv(B, tb),)                      # edge block masked by Pallas

    kernel = functools.partial(_mlp_kernel, n_layers=n_layers, slope=slope)

    in_specs = [pl.BlockSpec((tb, in_dim), lambda i: (i, 0))]
    for wt in w_pad:
        # Grid-invariant block: same (0,0) tile every step, stays resident.
        in_specs.append(pl.BlockSpec(wt.shape, lambda i: (0, 0)))
    out_specs = pl.BlockSpec((tb, out_pad), lambda i: (i, 0))

    # VMEM footprint estimate; only set vmem_limit_bytes if we'd exceed the
    # conservative default scoped limit.
    feat_max = max(w.shape[1] for w in w_pad)
    est = (2 * tb * in_dim * 4                    # x blocks (f32, 2 buffers)
           + 2 * tb * out_pad * 2                 # out blocks (bf16, 2 buffers)
           + 2 * sum(w.size for w in w_pad) * 2   # weight blocks (bf16)
           + tb * feat_max * 6)                   # f32 acc + bf16 h working set
    cp_kwargs = dict(dimension_semantics=("parallel",))
    if est > (24 << 20):
        cp_kwargs["vmem_limit_bytes"] = int(min(est + (8 << 20), 128 << 20))

    out_padded = pl.pallas_call(
        kernel,
        out_shape=jax.ShapeDtypeStruct((B, out_pad), jnp.bfloat16),
        grid_spec=pltpu.PrefetchScalarGridSpec(
            num_scalar_prefetch=0,
            grid=grid,
            in_specs=in_specs,
            out_specs=out_specs,
        ),
        compiler_params=pltpu.CompilerParams(**cp_kwargs),
    )(x2d, *w_pad)

    return out_padded[:, :out_dim].astype(x.dtype)


# ----------------------------------------------------------------------------
# Deterministic weight construction matching the PyTorch module
# ----------------------------------------------------------------------------
def xavier_uniform(key, out_f, in_f):
    """xavier_uniform_ equivalent for an nn.Linear weight of shape (out, in)."""
    bound = (6.0 / (in_f + out_f)) ** 0.5
    return jax.random.uniform(key, (out_f, in_f), jnp.float32, -bound, bound)


def build_mlp_weights(key, input_size, output_size, hidden_size, depth):
    """Matches MLP.architecture = [input] + depth*[hidden] + [output]."""
    arch = [input_size] + depth * [hidden_size] + [output_size]
    weights = []
    for i in range(len(arch) - 1):
        key, sub = jax.random.split(key)
        weights.append(xavier_uniform(sub, arch[i + 1], arch[i]))
    return weights


def reference_forward(x, weights, slope=0.1):
    """Pure-JAX f32 reference mirroring the PyTorch forward."""
    h = x.reshape(x.shape[0], -1)
    for i, w in enumerate(weights):
        h = h @ w.T
        if i != len(weights) - 1:
            h = jnp.where(h >= 0, h, slope * h)
    return h


if __name__ == "__main__":
    # Shapes consistent with the module: input_size=64 (flattened from
    # (4,4,4)), hidden_size=32, depth=3, output_size=10, batch=8.
    key = jax.random.PRNGKey(0)
    k_x, k_w = jax.random.split(key)

    batch, output_size = 8, 10
    x = jax.random.normal(k_x, (batch, 4, 4, 4), dtype=jnp.float32)
    weights = build_mlp_weights(k_w, input_size=64, output_size=output_size,
                                hidden_size=32, depth=3)

    # One-time prep (transpose + pad + bf16 cast), hoisted out of the forward.
    w_pad = prepare_weights(weights)

    out = mlp_forward(x, w_pad, out_dim=output_size, slope=0.1)
    out = jax.block_until_ready(out)

    ref = reference_forward(x, weights, slope=0.1)
    assert out.shape == (batch, output_size)
    # bf16 MXU operands / bf16 output (f32 accumulate) -> loosened tolerance
    # vs the f32 reference; accepting bf16 accuracy is an explicit decision.
    assert jnp.allclose(out, ref, atol=1e-1, rtol=1e-1), "mismatch vs reference"

    print("KERNEL_OK")
</pallas_src>

<mosaic_0001>
module attributes {stable_mosaic.version = 11 : i64} {
  func.func @_mlp_kernel(%arg0: i32, %arg1: memref<8x64xf32, #tpu.memory_space<vmem>>, %arg2: memref<64x128xbf16, #tpu.memory_space<vmem>>, %arg3: memref<128x128xbf16, #tpu.memory_space<vmem>>, %arg4: memref<128x128xbf16, #tpu.memory_space<vmem>>, %arg5: memref<128x128xbf16, #tpu.memory_space<vmem>>, %arg6: memref<8x128xbf16, #tpu.memory_space<vmem>>) attributes {dimension_semantics = [#tpu.dimension_semantics<parallel>], iteration_bounds = array<i64: 1>, scalar_prefetch = 0 : i64, scratch_operands = 0 : i64, tpu.core_type = #tpu.core_type<tc>, window_params = [{transform_indices = @transform_0, window_bounds = array<i64: 8, 64>}, {pipeline_mode = #tpu.pipeline_mode<synchronous>, transform_indices = @transform_1, window_bounds = array<i64: 64, 128>}, {pipeline_mode = #tpu.pipeline_mode<synchronous>, transform_indices = @transform_2, window_bounds = array<i64: 128, 128>}, {pipeline_mode = #tpu.pipeline_mode<synchronous>, transform_indices = @transform_3, window_bounds = array<i64: 128, 128>}, {pipeline_mode = #tpu.pipeline_mode<synchronous>, transform_indices = @transform_4, window_bounds = array<i64: 128, 128>}, {transform_indices = @transform_5, window_bounds = array<i64: 8, 128>}]} {
    %c0 = arith.constant 0 : index
    %c0_0 = arith.constant 0 : index
    %0 = vector.load %arg1[%c0, %c0_0] : memref<8x64xf32, #tpu.memory_space<vmem>>, vector<8x64xf32>
    %1 = arith.truncf %0 : vector<8x64xf32> to vector<8x64xbf16>
    %c0_1 = arith.constant 0 : index
    %c0_2 = arith.constant 0 : index
    %2 = vector.load %arg2[%c0_1, %c0_2] : memref<64x128xbf16, #tpu.memory_space<vmem>>, vector<64x128xbf16>
    %cst = arith.constant dense<0.000000e+00> : vector<8x128xf32>
    %3 = tpu.matmul %1, %2, %cst {dimension_numbers = #tpu.dot_dimension_numbers<[1], [0], [0], [1], [0, 0, 1, 1], [], []>} : vector<8x64xbf16>, vector<64x128xbf16>, vector<8x128xf32> -> vector<8x128xf32>
    %cst_3 = arith.constant 1.000000e-01 : f32
    %4 = vector.broadcast %cst_3 : f32 to vector<8x128xf32>
    %5 = arith.mulf %4, %3 : vector<8x128xf32>
    %6 = arith.maximumf %3, %5 : vector<8x128xf32>
    %7 = arith.truncf %6 : vector<8x128xf32> to vector<8x128xbf16>
    %c0_4 = arith.constant 0 : index
    %c0_5 = arith.constant 0 : index
    %8 = vector.load %arg3[%c0_4, %c0_5] : memref<128x128xbf16, #tpu.memory_space<vmem>>, vector<128x128xbf16>
    %cst_6 = arith.constant dense<0.000000e+00> : vector<8x128xf32>
    %9 = tpu.matmul %7, %8, %cst_6 {dimension_numbers = #tpu.dot_dimension_numbers<[1], [0], [0], [1], [0, 0, 1, 1], [], []>} : vector<8x128xbf16>, vector<128x128xbf16>, vector<8x128xf32> -> vector<8x128xf32>
    %cst_7 = arith.constant 1.000000e-01 : f32
    %10 = vector.broadcast %cst_7 : f32 to vector<8x128xf32>
    %11 = arith.mulf %10, %9 : vector<8x128xf32>
    %12 = arith.maximumf %9, %11 : vector<8x128xf32>
    %13 = arith.truncf %12 : vector<8x128xf32> to vector<8x128xbf16>
    %c0_8 = arith.constant 0 : index
    %c0_9 = arith.constant 0 : index
    %14 = vector.load %arg4[%c0_8, %c0_9] : memref<128x128xbf16, #tpu.memory_space<vmem>>, vector<128x128xbf16>
    %cst_10 = arith.constant dense<0.000000e+00> : vector<8x128xf32>
    %15 = tpu.matmul %13, %14, %cst_10 {dimension_numbers = #tpu.dot_dimension_numbers<[1], [0], [0], [1], [0, 0, 1, 1], [], []>} : vector<8x128xbf16>, vector<128x128xbf16>, vector<8x128xf32> -> vector<8x128xf32>
    %cst_11 = arith.constant 1.000000e-01 : f32
    %16 = vector.broadcast %cst_11 : f32 to vector<8x128xf32>
    %17 = arith.mulf %16, %15 : vector<8x128xf32>
    %18 = arith.maximumf %15, %17 : vector<8x128xf32>
    %19 = arith.truncf %18 : vector<8x128xf32> to vector<8x128xbf16>
    %c0_12 = arith.constant 0 : index
    %c0_13 = arith.constant 0 : index
    %20 = vector.load %arg5[%c0_12, %c0_13] : memref<128x128xbf16, #tpu.memory_space<vmem>>, vector<128x128xbf16>
    %cst_14 = arith.constant dense<0.000000e+00> : vector<8x128xf32>
    %21 = tpu.matmul %19, %20, %cst_14 {dimension_numbers = #tpu.dot_dimension_numbers<[1], [0], [0], [1], [0, 0, 1, 1], [], []>} : vector<8x128xbf16>, vector<128x128xbf16>, vector<8x128xf32> -> vector<8x128xf32>
    %22 = arith.truncf %21 : vector<8x128xf32> to vector<8x128xbf16>
    %c0_15 = arith.constant 0 : index
    %c0_16 = arith.constant 0 : index
    %23 = vector.load %arg6[%c0_15, %c0_16] : memref<8x128xbf16, #tpu.memory_space<vmem>>, vector<8x128xbf16>
    tpu.vector_store %arg6[%c0_15, %c0_16], %22 {strides = array<i32>} : memref<8x128xbf16, #tpu.memory_space<vmem>>, vector<8x128xbf16>,
    return
  }
  func.func @transform_0(%arg0: i32) -> (i32, i32) {
    %c0_i32 = arith.constant 0 : i32
    %c0_i32_0 = arith.constant 0 : i32
    return %arg0, %c0_i32 : i32, i32
  }
  func.func @transform_1(%arg0: i32) -> (i32, i32) {
    %c0_i32 = arith.constant 0 : i32
    %c0_i32_0 = arith.constant 0 : i32
    %c0_i32_1 = arith.constant 0 : i32
    return %c0_i32, %c0_i32_0 : i32, i32
  }
  func.func @transform_2(%arg0: i32) -> (i32, i32) {
    %c0_i32 = arith.constant 0 : i32
    %c0_i32_0 = arith.constant 0 : i32
    %c0_i32_1 = arith.constant 0 : i32
    return %c0_i32, %c0_i32_0 : i32, i32
  }
  func.func @transform_3(%arg0: i32) -> (i32, i32) {
    %c0_i32 = arith.constant 0 : i32
    %c0_i32_0 = arith.constant 0 : i32
    %c0_i32_1 = arith.constant 0 : i32
    return %c0_i32, %c0_i32_0 : i32, i32
  }
  func.func @transform_4(%arg0: i32) -> (i32, i32) {
    %c0_i32 = arith.constant 0 : i32
    %c0_i32_0 = arith.constant 0 : i32
    %c0_i32_1 = arith.constant 0 : i32
    return %c0_i32, %c0_i32_0 : i32, i32
  }
  func.func @transform_5(%arg0: i32) -> (i32, i32) {
    %c0_i32 = arith.constant 0 : i32
    %c0_i32_0 = arith.constant 0 : i32
    return %arg0, %c0_i32 : i32, i32
  }
}

</mosaic_0001>

<llo_original>
// kernel: mlp_forward.1
$region0: #{mlp_forward.1}
  #allocation0 [shape = 'u32[]', space=smem, size = 0x4, offset = 0x4, fixed_abs, tag = 'smem constant byte address 0x4 - core index']
  #allocation1 [shape = 'u32[144,128]{1,0:T(1,128)}', space=vmem, size = 0x12000, scoped, tag = 'internal scratch']
  %s0 = inlined_call_operand.vmem [shape: f32[8,64], index: 0, kind: input, shape index: {}]
  %s1 = inlined_call_operand.hbm [shape: bf16[64,128], index: 1, kind: input, shape index: {}]
  %s2 = inlined_call_operand.vmem [shape: bf16[128,128], index: 2, kind: input, shape index: {}]
  %s3 = inlined_call_operand.hbm [shape: bf16[128,128], index: 3, kind: input, shape index: {}]
  %s4 = inlined_call_operand.hbm [shape: bf16[128,128], index: 4, kind: input, shape index: {}]
  %s5 = inlined_call_operand.vmem [shape: bf16[8,128], index: 5, kind: output, shape index: {}]
  %s6 = sld [smem:[#allocation0]]
  $region42: #{mlp_forward.1} parent=0
    _
  %s8 = ssub.s32 1, %s6
  %s9 = scalar_select 0, %s8, %s6
  $region1: #{mlp_forward.1} parent=0
    #allocation2 [shape = 'u8[16384]{0}', space=vmem, size = 0x4000, scoped, tag = 'input window, operand 1, single buffered']
    #allocation3 [shape = 's32[1]{0}', space=sflag, size = 0x4, scoped, tag = 'scoped memory for mlp_forward.1']
    #allocation4 [shape = 'u8[32768]{0}', space=vmem, size = 0x8000, scoped, tag = 'input window, operand 3, single buffered']
    #allocation5 [shape = 's32[1]{0}', space=sflag, size = 0x4, scoped, tag = 'scoped memory for mlp_forward.1']
    #allocation6 [shape = 'u8[32768]{0}', space=vmem, size = 0x8000, scoped, tag = 'input window, operand 4, single buffered']
    %10 = vsyncpa [#allocation3], 0
    %11 = vsyncpa [#allocation5], 0
    // Predicated region
    $region2: #{mlp_forward.1} parent=1 // pred_check
      _
    $region3: #{mlp_forward.1} parent=1 // pred_check_branch
      %13 = sbr.rel (0) target = $region5
    $region4: #{mlp_forward.1} parent=1 // pred_region
      _
    $region5: #{mlp_forward.1} parent=1 // pred_fallthru
      _
    // Predicated region
    $region6: #{mlp_forward.1} parent=1 // pred_check
      _
    $region7: #{mlp_forward.1} parent=1 // pred_check_branch
      %15 = sbr.rel (0) target = $region9
    $region8: #{mlp_forward.1} parent=1 // pred_region
      %s17 = ssub.s32 512, 512
      %18 = vsyncadd [#allocation3], %s17
      %s19 = sshll.u32 [#allocation2], 4
      %s20 = int_to_ptr.vmem [resolvable:$true] %s19
      %25 = dma.hbm_to_vmem [thread:$0]  %s1, 512, %s20, [#allocation3], 64, 64, 4
    $region9: #{mlp_forward.1} parent=1 // pred_fallthru
      _
    // Predicated region
    $region10: #{mlp_forward.1} parent=1 // pred_check
      _
    $region11: #{mlp_forward.1} parent=1 // pred_check_branch
      %27 = sbr.rel (0) target = $region13
    $region12: #{mlp_forward.1} parent=1 // pred_region
      _
    $region13: #{mlp_forward.1} parent=1 // pred_fallthru
      _
    // Predicated region
    $region14: #{mlp_forward.1} parent=1 // pred_check
      _
    $region15: #{mlp_forward.1} parent=1 // pred_check_branch
      %29 = sbr.rel (0) target = $region17
    $region16: #{mlp_forward.1} parent=1 // pred_region
      %s31 = ssub.s32 1024, 1024
      %32 = vsyncadd [#allocation5], %s31
      %s33 = sshll.u32 [#allocation4], 4
      %s34 = int_to_ptr.vmem [resolvable:$true] %s33
      %39 = dma.hbm_to_vmem [thread:$0]  %s3, 1024, %s34, [#allocation5], 64, 64, 4
    $region17: #{mlp_forward.1} parent=1 // pred_fallthru
      _
    // Predicated region
    $region18: #{mlp_forward.1} parent=1 // pred_check
      _
    $region19: #{mlp_forward.1} parent=1 // pred_check_branch
      %41 = sbr.rel (0) target = $region21
    $region20: #{mlp_forward.1} parent=1 // pred_region
      %s43 = ssub.s32 1024, 1024
      %44 = vsyncadd [#allocation5], %s43
      %s45 = sshll.u32 [#allocation6], 4
      %s46 = int_to_ptr.vmem [resolvable:$true] %s45
      %51 = dma.hbm_to_vmem [thread:$0]  %s4, 1024, %s46, [#allocation5], 64, 64, 4
    $region21: #{mlp_forward.1} parent=1 // pred_fallthru
      _
    // Predicated region
    $region22: #{mlp_forward.1} parent=1 // pred_check
      _
    $region23: #{mlp_forward.1} parent=1 // pred_check_branch
      %53 = sbr.rel (0) target = $region25
    $region24: #{mlp_forward.1} parent=1 // pred_region
      %54 = dma.done [#allocation3], 512
    $region25: #{mlp_forward.1} parent=1 // pred_fallthru
      _
    // Predicated region
    $region26: #{mlp_forward.1} parent=1 // pred_check
      _
    $region27: #{mlp_forward.1} parent=1 // pred_check_branch
      %56 = sbr.rel (0) target = $region29
    $region28: #{mlp_forward.1} parent=1 // pred_region
      %57 = dma.done [#allocation5], 1024
    $region29: #{mlp_forward.1} parent=1 // pred_fallthru
      _
    // Predicated region
    $region30: #{mlp_forward.1} parent=1 // pred_check
      _
    $region31: #{mlp_forward.1} parent=1 // pred_check_branch
      %59 = sbr.rel (0) target = $region33
    $region32: #{mlp_forward.1} parent=1 // pred_region
      %60 = dma.done [#allocation5], 1024
    $region33: #{mlp_forward.1} parent=1 // pred_fallthru
      _
    %v62 = vld [vmem:[%s0] sm:$0xff]
    %v63 = vpack.c.bf16 %v62, %v62
    %v64 = vld [vmem:[#allocation2] sm:$0xf]
    %v65 = vld [vmem:[#allocation2 + $0x4] sm:$0xf]
    %v66 = vld [vmem:[#allocation2 + $0x8] sm:$0xf]
    %v67 = vld [vmem:[#allocation2 + $0xc] sm:$0xf]
    %v68 = vld [vmem:[#allocation2 + $0x10] sm:$0xf]
    %v69 = vld [vmem:[#allocation2 + $0x14] sm:$0xf]
    %v70 = vld [vmem:[#allocation2 + $0x18] sm:$0xf]
    %v71 = vld [vmem:[#allocation2 + $0x1c] sm:$0xf]
    %v80 = vunpack.c.l.b16 %v64
    %v81 = vunpack.c.l.b16 %v65
    %v82 = vunpack.c.l.b16 %v66
    %v83 = vunpack.c.l.b16 %v67
    %v84 = vunpack.c.l.b16 %v68
    %v85 = vunpack.c.l.b16 %v69
    %v86 = vunpack.c.l.b16 %v70
    %v87 = vunpack.c.l.b16 %v71
    %v88 = vpack.c.b16 %v81, %v80
    %v89 = vpack.c.b16 %v83, %v82
    %v90 = vpack.c.b16 %v85, %v84
    %v91 = vpack.c.b16 %v87, %v86
    %vm96 = vcmask 523264
    %v98 = vsel %vm96, %v63, 0
    %100 = vmatprep.subr.bf16.mxu0 0
    %101 = vmatpush1.bf16.msra.mxu0 0
    %102 = vmatprep.subr.bf16.mxu0 0
    %103 = vmatpush1.bf16.msra.mxu0 0
    %104 = vmatprep.subr.bf16.mxu0 0
    %105 = vmatpush1.bf16.msra.mxu0 0
    %106 = vmatprep.subr.bf16.mxu0 0
    %107 = vmatpush1.bf16.msra.mxu0 0
    %108 = vmatprep.subr.bf16.mxu0 0
    %109 = vmatpush1.bf16.msra.mxu0 %v91
    %110 = vmatprep.subr.bf16.mxu0 0
    %111 = vmatpush1.bf16.msra.mxu0 %v90
    %112 = vmatprep.subr.bf16.mxu0 0
    %113 = vmatpush1.bf16.msra.mxu0 %v89
    %114 = vmatprep.subr.bf16.mxu0 0
    %115 = vmatpush1.bf16.msra.mxu0 %v88
    %116 = vmatprep.subr.bf16.mxu0 0
    %117 = vmatpush2.bf16.msra.mxu0 0
    %118 = vmatprep.subr.bf16.mxu0 0
    %119 = vmatpush2.bf16.msra.mxu0 0
    %120 = vmatprep.subr.bf16.mxu0 0
    %121 = vmatpush2.bf16.msra.mxu0 0
    %122 = vmatprep.subr.bf16.mxu0 0
    %123 = vmatpush2.bf16.msra.mxu0 0
    %124 = vmatprep.subr.bf16.mxu0 0
    %125 = vmatpush2.bf16.msra.mxu0 0
    %126 = vmatprep.subr.bf16.mxu0 0
    %127 = vmatpush2.bf16.msra.mxu0 0
    %128 = vmatprep.subr.bf16.mxu0 0
    %129 = vmatpush2.bf16.msra.mxu0 0
    %130 = vmatprep.subr.bf16.mxu0 0
    %131 = vmatpush2.bf16.msra.mxu0 0
    %132 = vmatprep.mubr.bf16.mxu0 0
    %133 = vmatmul.mubr.bf16.gmra.mxu0 %v98
    %v134 = vpop.f32.mrf.mxu0
    %v135 = vadd.f32 0.0, %v134
    %v136 = vpop.f32.mrf.mxu0
    %v137 = vpop.f32.mrf.mxu0
    %v138 = vpop.f32.mrf.mxu0
    %139 = vdwg.mxu0
    %v140 = vmul.f32 %v135, 0.1
    %v141 = vmax.f32 %v135, %v140
    %v142 = vpack.c.bf16 %v141, %v141
    %v143 = vld [vmem:[%s2] sm:$0xf]
    %v144 = vld [vmem:[%s2 + $0x4] sm:$0xf]
    %v145 = vld [vmem:[%s2 + $0x8] sm:$0xf]
    %v146 = vld [vmem:[%s2 + $0xc] sm:$0xf]
    %v147 = vld [vmem:[%s2 + $0x10] sm:$0xf]
    %v148 = vld [vmem:[%s2 + $0x14] sm:$0xf]
    %v149 = vld [vmem:[%s2 + $0x18] sm:$0xf]
    %v150 = vld [vmem:[%s2 + $0x1c] sm:$0xf]
    %v151 = vld [vmem:[%s2 + $0x20] sm:$0xf]
    %v152 = vld [vmem:[%s2 + $0x24] sm:$0xf]
    %v153 = vld [vmem:[%s2 + $0x28] sm:$0xf]
    %v154 = vld [vmem:[%s2 + $0x2c] sm:$0xf]
    %v155 = vld [vmem:[%s2 + $0x30] sm:$0xf]
    %v156 = vld [vmem:[%s2 + $0x34] sm:$0xf]
    %v157 = vld [vmem:[%s2 + $0x38] sm:$0xf]
    %v158 = vld [vmem:[%s2 + $0x3c] sm:$0xf]
    %v175 = vunpack.c.l.b16 %v143
    %v176 = vunpack.c.l.b16 %v144
    %v177 = vunpack.c.l.b16 %v145
    %v178 = vunpack.c.l.b16 %v146
    %v179 = vunpack.c.l.b16 %v147
    %v180 = vunpack.c.l.b16 %v148
    %v181 = vunpack.c.l.b16 %v149
    %v182 = vunpack.c.l.b16 %v150
    %v183 = vunpack.c.l.b16 %v151
    %v184 = vunpack.c.l.b16 %v152
    %v185 = vunpack.c.l.b16 %v153
    %v186 = vunpack.c.l.b16 %v154
    %v187 = vunpack.c.l.b16 %v155
    %v188 = vunpack.c.l.b16 %v156
    %v189 = vunpack.c.l.b16 %v157
    %v190 = vunpack.c.l.b16 %v158
    %v191 = vpack.c.b16 %v176, %v175
    %v192 = vpack.c.b16 %v178, %v177
    %v193 = vpack.c.b16 %v180, %v179
    %v194 = vpack.c.b16 %v182, %v181
    %v195 = vpack.c.b16 %v184, %v183
    %v196 = vpack.c.b16 %v186, %v185
    %v197 = vpack.c.b16 %v188, %v187
    %v198 = vpack.c.b16 %v190, %v189
    %207 = vmatprep.subr.bf16.mxu0 0
    %208 = vmatpush1.bf16.msra.mxu0 %v198
    %209 = vmatprep.subr.bf16.mxu0 0
    %210 = vmatpush1.bf16.msra.mxu0 %v197
    %211 = vmatprep.subr.bf16.mxu0 0
    %212 = vmatpush1.bf16.msra.mxu0 %v196
    %213 = vmatprep.subr.bf16.mxu0 0
    %214 = vmatpush1.bf16.msra.mxu0 %v195
    %215 = vmatprep.subr.bf16.mxu0 0
    %216 = vmatpush1.bf16.msra.mxu0 %v194
    %217 = vmatprep.subr.bf16.mxu0 0
    %218 = vmatpush1.bf16.msra.mxu0 %v193
    %219 = vmatprep.subr.bf16.mxu0 0
    %220 = vmatpush1.bf16.msra.mxu0 %v192
    %221 = vmatprep.subr.bf16.mxu0 0
    %222 = vmatpush1.bf16.msra.mxu0 %v191
    %223 = vmatprep.subr.bf16.mxu0 0
    %224 = vmatpush2.bf16.msra.mxu0 0
    %225 = vmatprep.subr.bf16.mxu0 0
    %226 = vmatpush2.bf16.msra.mxu0 0
    %227 = vmatprep.subr.bf16.mxu0 0
    %228 = vmatpush2.bf16.msra.mxu0 0
    %229 = vmatprep.subr.bf16.mxu0 0
    %230 = vmatpush2.bf16.msra.mxu0 0
    %231 = vmatprep.subr.bf16.mxu0 0
    %232 = vmatpush2.bf16.msra.mxu0 0
    %233 = vmatprep.subr.bf16.mxu0 0
    %234 = vmatpush2.bf16.msra.mxu0 0
    %235 = vmatprep.subr.bf16.mxu0 0
    %236 = vmatpush2.bf16.msra.mxu0 0
    %237 = vmatprep.subr.bf16.mxu0 0
    %238 = vmatpush2.bf16.msra.mxu0 0
    %239 = vmatprep.mubr.bf16.mxu0 0
    %240 = vmatmul.mubr.bf16.gmra.mxu0 %v142
    %v241 = vpop.f32.mrf.mxu0
    %v242 = vadd.f32 0.0, %v241
    %v243 = vpop.f32.mrf.mxu0
    %v244 = vpop.f32.mrf.mxu0
    %v245 = vpop.f32.mrf.mxu0
    %246 = vdwg.mxu0
    %v247 = vmul.f32 %v242, 0.1
    %v248 = vmax.f32 %v242, %v247
    %v249 = vpack.c.bf16 %v248, %v248
    %v250 = vld [vmem:[#allocation4] sm:$0xf]
    %v251 = vld [vmem:[#allocation4 + $0x4] sm:$0xf]
    %v252 = vld [vmem:[#allocation4 + $0x8] sm:$0xf]
    %v253 = vld [vmem:[#allocation4 + $0xc] sm:$0xf]
    %v254 = vld [vmem:[#allocation4 + $0x10] sm:$0xf]
    %v255 = vld [vmem:[#allocation4 + $0x14] sm:$0xf]
    %v256 = vld [vmem:[#allocation4 + $0x18] sm:$0xf]
    %v257 = vld [vmem:[#allocation4 + $0x1c] sm:$0xf]
    %v258 = vld [vmem:[#allocation4 + $0x20] sm:$0xf]
    %v259 = vld [vmem:[#allocation4 + $0x24] sm:$0xf]
    %v260 = vld [vmem:[#allocation4 + $0x28] sm:$0xf]
    %v261 = vld [vmem:[#allocation4 + $0x2c] sm:$0xf]
    %v262 = vld [vmem:[#allocation4 + $0x30] sm:$0xf]
    %v263 = vld [vmem:[#allocation4 + $0x34] sm:$0xf]
    %v264 = vld [vmem:[#allocation4 + $0x38] sm:$0xf]
    %v265 = vld [vmem:[#allocation4 + $0x3c] sm:$0xf]
    %v282 = vunpack.c.l.b16 %v250
    %v283 = vunpack.c.l.b16 %v251
    %v284 = vunpack.c.l.b16 %v252
    %v285 = vunpack.c.l.b16 %v253
    %v286 = vunpack.c.l.b16 %v254
    %v287 = vunpack.c.l.b16 %v255
    %v288 = vunpack.c.l.b16 %v256
    %v289 = vunpack.c.l.b16 %v257
    %v290 = vunpack.c.l.b16 %v258
    %v291 = vunpack.c.l.b16 %v259
    %v292 = vunpack.c.l.b16 %v260
    %v293 = vunpack.c.l.b16 %v261
    %v294 = vunpack.c.l.b16 %v262
    %v295 = vunpack.c.l.b16 %v263
    %v296 = vunpack.c.l.b16 %v264
    %v297 = vunpack.c.l.b16 %v265
    %v298 = vpack.c.b16 %v283, %v282
    %v299 = vpack.c.b16 %v285, %v284
    %v300 = vpack.c.b16 %v287, %v286
    %v301 = vpack.c.b16 %v289, %v288
    %v302 = vpack.c.b16 %v291, %v290
    %v303 = vpack.c.b16 %v293, %v292
    %v304 = vpack.c.b16 %v295, %v294
    %v305 = vpack.c.b16 %v297, %v296
    %314 = vmatprep.subr.bf16.mxu0 0
    %315 = vmatpush1.bf16.msra.mxu0 %v305
    %316 = vmatprep.subr.bf16.mxu0 0
    %317 = vmatpush1.bf16.msra.mxu0 %v304
    %318 = vmatprep.subr.bf16.mxu0 0
    %319 = vmatpush1.bf16.msra.mxu0 %v303
    %320 = vmatprep.subr.bf16.mxu0 0
    %321 = vmatpush1.bf16.msra.mxu0 %v302
    %322 = vmatprep.subr.bf16.mxu0 0
    %323 = vmatpush1.bf16.msra.mxu0 %v301
    %324 = vmatprep.subr.bf16.mxu0 0
    %325 = vmatpush1.bf16.msra.mxu0 %v300
    %326 = vmatprep.subr.bf16.mxu0 0
    %327 = vmatpush1.bf16.msra.mxu0 %v299
    %328 = vmatprep.subr.bf16.mxu0 0
    %329 = vmatpush1.bf16.msra.mxu0 %v298
    %330 = vmatprep.subr.bf16.mxu0 0
    %331 = vmatpush2.bf16.msra.mxu0 0
    %332 = vmatprep.subr.bf16.mxu0 0
    %333 = vmatpush2.bf16.msra.mxu0 0
    %334 = vmatprep.subr.bf16.mxu0 0
    %335 = vmatpush2.bf16.msra.mxu0 0
    %336 = vmatprep.subr.bf16.mxu0 0
    %337 = vmatpush2.bf16.msra.mxu0 0
    %338 = vmatprep.subr.bf16.mxu0 0
    %339 = vmatpush2.bf16.msra.mxu0 0
    %340 = vmatprep.subr.bf16.mxu0 0
    %341 = vmatpush2.bf16.msra.mxu0 0
    %342 = vmatprep.subr.bf16.mxu0 0
    %343 = vmatpush2.bf16.msra.mxu0 0
    %344 = vmatprep.subr.bf16.mxu0 0
    %345 = vmatpush2.bf16.msra.mxu0 0
    %346 = vmatprep.mubr.bf16.mxu0 0
    %347 = vmatmul.mubr.bf16.gmra.mxu0 %v249
    %v348 = vpop.f32.mrf.mxu0
    %v349 = vadd.f32 0.0, %v348
    %v350 = vpop.f32.mrf.mxu0
    %v351 = vpop.f32.mrf.mxu0
    %v352 = vpop.f32.mrf.mxu0
    %353 = vdwg.mxu0
    %v354 = vmul.f32 %v349, 0.1
    %v355 = vmax.f32 %v349, %v354
    %v356 = vpack.c.bf16 %v355, %v355
    %v357 = vld [vmem:[#allocation6] sm:$0xf]
    %v358 = vld [vmem:[#allocation6 + $0x4] sm:$0xf]
    %v359 = vld [vmem:[#allocation6 + $0x8] sm:$0xf]
    %v360 = vld [vmem:[#allocation6 + $0xc] sm:$0xf]
    %v361 = vld [vmem:[#allocation6 + $0x10] sm:$0xf]
    %v362 = vld [vmem:[#allocation6 + $0x14] sm:$0xf]
    %v363 = vld [vmem:[#allocation6 + $0x18] sm:$0xf]
    %v364 = vld [vmem:[#allocation6 + $0x1c] sm:$0xf]
    %v365 = vld [vmem:[#allocation6 + $0x20] sm:$0xf]
    %v366 = vld [vmem:[#allocation6 + $0x24] sm:$0xf]
    %v367 = vld [vmem:[#allocation6 + $0x28] sm:$0xf]
    %v368 = vld [vmem:[#allocation6 + $0x2c] sm:$0xf]
    %v369 = vld [vmem:[#allocation6 + $0x30] sm:$0xf]
    %v370 = vld [vmem:[#allocation6 + $0x34] sm:$0xf]
    %v371 = vld [vmem:[#allocation6 + $0x38] sm:$0xf]
    %v372 = vld [vmem:[#allocation6 + $0x3c] sm:$0xf]
    %v389 = vunpack.c.l.b16 %v357
    %v390 = vunpack.c.l.b16 %v358
    %v391 = vunpack.c.l.b16 %v359
    %v392 = vunpack.c.l.b16 %v360
    %v393 = vunpack.c.l.b16 %v361
    %v394 = vunpack.c.l.b16 %v362
    %v395 = vunpack.c.l.b16 %v363
    %v396 = vunpack.c.l.b16 %v364
    %v397 = vunpack.c.l.b16 %v365
    %v398 = vunpack.c.l.b16 %v366
    %v399 = vunpack.c.l.b16 %v367
    %v400 = vunpack.c.l.b16 %v368
    %v401 = vunpack.c.l.b16 %v369
    %v402 = vunpack.c.l.b16 %v370
    %v403 = vunpack.c.l.b16 %v371
    %v404 = vunpack.c.l.b16 %v372
    %v405 = vpack.c.b16 %v390, %v389
    %v406 = vpack.c.b16 %v392, %v391
    %v407 = vpack.c.b16 %v394, %v393
    %v408 = vpack.c.b16 %v396, %v395
    %v409 = vpack.c.b16 %v398, %v397
    %v410 = vpack.c.b16 %v400, %v399
    %v411 = vpack.c.b16 %v402, %v401
    %v412 = vpack.c.b16 %v404, %v403
    %421 = vmatprep.subr.bf16.mxu0 0
    %422 = vmatpush1.bf16.msra.mxu0 %v412
    %423 = vmatprep.subr.bf16.mxu0 0
    %424 = vmatpush1.bf16.msra.mxu0 %v411
    %425 = vmatprep.subr.bf16.mxu0 0
    %426 = vmatpush1.bf16.msra.mxu0 %v410
    %427 = vmatprep.subr.bf16.mxu0 0
    %428 = vmatpush1.bf16.msra.mxu0 %v409
    %429 = vmatprep.subr.bf16.mxu0 0
    %430 = vmatpush1.bf16.msra.mxu0 %v408
    %431 = vmatprep.subr.bf16.mxu0 0
    %432 = vmatpush1.bf16.msra.mxu0 %v407
    %433 = vmatprep.subr.bf16.mxu0 0
    %434 = vmatpush1.bf16.msra.mxu0 %v406
    %435 = vmatprep.subr.bf16.mxu0 0
    %436 = vmatpush1.bf16.msra.mxu0 %v405
    %437 = vmatprep.subr.bf16.mxu0 0
    %438 = vmatpush2.bf16.msra.mxu0 0
    %439 = vmatprep.subr.bf16.mxu0 0
    %440 = vmatpush2.bf16.msra.mxu0 0
    %441 = vmatprep.subr.bf16.mxu0 0
    %442 = vmatpush2.bf16.msra.mxu0 0
    %443 = vmatprep.subr.bf16.mxu0 0
    %444 = vmatpush2.bf16.msra.mxu0 0
    %445 = vmatprep.subr.bf16.mxu0 0
    %446 = vmatpush2.bf16.msra.mxu0 0
    %447 = vmatprep.subr.bf16.mxu0 0
    %448 = vmatpush2.bf16.msra.mxu0 0
    %449 = vmatprep.subr.bf16.mxu0 0
    %450 = vmatpush2.bf16.msra.mxu0 0
    %451 = vmatprep.subr.bf16.mxu0 0
    %452 = vmatpush2.bf16.msra.mxu0 0
    %453 = vmatprep.mubr.bf16.mxu0 0
    %454 = vmatmul.mubr.bf16.gmra.mxu0 %v356
    %v455 = vpop.f32.mrf.mxu0
    %v456 = vadd.f32 0.0, %v455
    %v457 = vpop.f32.mrf.mxu0
    %v458 = vpop.f32.mrf.mxu0
    %v459 = vpop.f32.mrf.mxu0
    %460 = vdwg.mxu0
    %v461 = vpack.c.bf16 %v456, %v456
    %462 = vst [vmem:[%s5] sm:$0xf] %v461
    // Predicated region
    $region34: #{mlp_forward.1} parent=1 // pred_check
      _
    $region35: #{mlp_forward.1} parent=1 // pred_check_branch
      %464 = sbr.rel (0) target = $region37
    $region36: #{mlp_forward.1} parent=1 // pred_region
      _
    $region37: #{mlp_forward.1} parent=1 // pred_fallthru
      _
    // Predicated region
    $region38: #{mlp_forward.1} parent=1 // pred_check
      _
    $region39: #{mlp_forward.1} parent=1 // pred_check_branch
      %466 = sbr.rel (0) target = $region41
    $region40: #{mlp_forward.1} parent=1 // pred_region
      _
    $region41: #{mlp_forward.1} parent=1 // pred_fallthru
      _
    %467 = vsyncpa [#allocation3], 1
    %468 = vsyncpa [#allocation5], 1

</llo_original>
